<compile_context>
chip_gen: v5e
topology: v5e:2x2
jax: 0.10.0
libtpu: 0.0.40
codegen_flags: <defaults>
</compile_context>

<pallas_src>
import functools

import jax
import jax.numpy as jnp
from jax.experimental import pallas as pl
from jax.experimental.pallas import tpu as pltpu


def _round_up(x, m):
    return ((x + m - 1) // m) * m


def _cdiv(a, b):
    return -(-a // b)


def _mlp_group_kernel(*refs, n_layers, act_on_last, compute_dtype):
    """Fused chain of bias-free Linears (+ leaky_relu) on one batch tile.

    refs = (x_ref, w_ref_0, ..., w_ref_{n_layers-1}, o_ref).
    Weights live in VMEM in `compute_dtype`; accumulation is always f32.
    """
    x_ref = refs[0]
    w_refs = refs[1:1 + n_layers]
    o_ref = refs[1 + n_layers]

    h = x_ref[...]
    for i in range(n_layers):
        h = jnp.dot(h.astype(compute_dtype), w_refs[i][...],
                    preferred_element_type=jnp.float32)
        if i < n_layers - 1 or act_on_last:
            # torch.nn.functional.leaky_relu default negative_slope = 0.01
            h = jnp.where(h >= 0, h, jnp.float32(0.01) * h)
    o_ref[...] = h.astype(o_ref.dtype)


class ClassicalNeuralNetworkPallas:
    """JAX/Pallas port of ClassicalNeuralNetwork (bias-free MLP)."""

    def __init__(self, size, key, compute_dtype=jnp.bfloat16):
        self.size = tuple(int(s) for s in size)
        self.n_layers = len(self.size) - 1
        self.d = sum(self.size[i] * self.size[i + 1] for i in range(self.n_layers))
        self.compute_dtype = compute_dtype

        # Per-layer K/N dims as seen by the kernel:
        #  - layer 0 consumes raw (unpadded) input features,
        #  - the global last layer produces raw (unpadded) output features,
        #  - hidden dims are padded to 128 lanes (lane-dense intermediates).
        self.k_dims = [self.size[0]] + [_round_up(s, 128) for s in self.size[1:-1]]
        self.n_dims = [_round_up(s, 128) for s in self.size[1:-1]] + [self.size[-1]]

        keys = jax.random.split(key, self.n_layers)
        self.weights_t = []       # logical (in_f, out_f) f32 -- reference path
        self.weights_t_pad = []   # padded (k_dim, n_dim) compute_dtype -- kernel
        for i in range(self.n_layers):
            in_f, out_f = self.size[i], self.size[i + 1]
            # nn.Linear-style uniform(-1/sqrt(in), 1/sqrt(in)) init, no bias.
            bound = 1.0 / (in_f ** 0.5)
            w = jax.random.uniform(keys[i], (out_f, in_f), dtype=jnp.float32,
                                   minval=-bound, maxval=bound)
            w_t = jnp.asarray(w.T)  # (in_f, out_f)
            self.weights_t.append(w_t)
            w_t_pad = jnp.zeros((self.k_dims[i], self.n_dims[i]), jnp.float32)
            w_t_pad = w_t_pad.at[:in_f, :out_f].set(w_t).astype(compute_dtype)
            self.weights_t_pad.append(w_t_pad)

        # ---- generation-aware VMEM sizing --------------------------------
        try:
            phys_vmem = int(pltpu.get_tpu_info().vmem_capacity_bytes)
        except Exception:
            phys_vmem = 64 * 1024 * 1024  # conservative default = v7x per-TC VMEM
        # Raise the scoped limit explicitly (defaults: 16 MiB v5e / 32 MiB
        # v6e / 32 MiB v7x), leave headroom for Mosaic-internal scratch.
        self.vmem_limit_bytes = int(min(100 * 1024 * 1024, phys_vmem * 0.75))
        self.vmem_budget = int(self.vmem_limit_bytes * 0.9)

        # ---- split layers into VMEM-resident groups ----------------------
        # Count weights at 2x so the double-buffered fallback path also fits.
        w_bytes = [2 * int(wp.size) * wp.dtype.itemsize for wp in self.weights_t_pad]
        half_budget = self.vmem_budget // 2
        self.layer_groups = []
        cur, cur_b = [], 0
        for i, wb in enumerate(w_bytes):
            if cur and cur_b + wb > half_budget:
                self.layer_groups.append(cur)
                cur, cur_b = [], 0
            cur.append(i)
            cur_b += wb
        self.layer_groups.append(cur)
        # TODO(synk): if a SINGLE layer's padded weight alone exceeds the VMEM
        # budget it would need K/N weight streaming (emit_pipeline); not
        # implemented -- such configs may fail to fit at compile time.

    # ----------------------------------------------------------------------
    def __call__(self, x):
        # x: (N, C, H, W) or already (N, features)
        h = jnp.reshape(x, (x.shape[0], -1)).astype(jnp.float32)
        B, in_f = h.shape
        assert in_f == self.size[0], (in_f, self.size[0])
        for layers in self.layer_groups:
            h = self._run_group(h, layers, B)
        return h  # (B, size[-1]) f32 -- no padding, no wrapper-side slicing

    # ----------------------------------------------------------------------
    def _run_group(self, h, layers, B):
        first, last = layers[0], layers[-1]
        n_layers = len(layers)
        k_in = self.k_dims[first]
        n_out = self.n_dims[last]
        act_on_last = (last != self.n_layers - 1)
        weights = [self.weights_t_pad[i] for i in layers]

        # ---- batch tile size (big tiles; include live activation scratch) --
        w_bytes = 2 * sum(int(w.size) * w.dtype.itemsize for w in weights)
        max_feat = max([k_in, n_out] + [self.n_dims[i] for i in layers])
        c_itemsize = jnp.dtype(self.compute_dtype).itemsize
        # double-buffered f32 in/out blocks + f32 & compute-dtype live copies
        # of the widest intermediate activation inside the fused chain.
        per_row = 4 * 2 * (k_in + n_out) + (4 + c_itemsize) * 2 * max_feat
        avail = max(self.vmem_budget - w_bytes, 0)
        tm_budget = max(8, (avail // max(per_row, 1)) // 8 * 8)
        cap = min(1024, tm_budget)
        # prefer >=2 balanced tiles once the batch is big enough so
        # dimension_semantics=("parallel",) can shard across v7x's 2 TCs.
        min_tiles = 2 if B >= 512 else 1
        n_tiles = max(_cdiv(B, cap), min_tiles)
        tm = _round_up(_cdiv(B, n_tiles), 8)
        grid = (_cdiv(B, tm),)  # ragged last tile; no wrapper-side padding

        flops = sum(2 * grid[0] * tm * self.k_dims[i] * self.n_dims[i]
                    for i in layers)
        bytes_accessed = 4 * B * (k_in + n_out) + w_bytes // 2
        cost = pl.CostEstimate(flops=int(flops), transcendentals=0,
                               bytes_accessed=int(bytes_accessed))

        kernel = functools.partial(
            _mlp_group_kernel, n_layers=n_layers,
            act_on_last=act_on_last, compute_dtype=self.compute_dtype)

        def _call(single_buffered_weights):
            in_specs = [pl.BlockSpec((tm, k_in), lambda i: (i, 0))]
            for w in weights:
                # Full-array block, constant index -> fetched once, VMEM-resident.
                if single_buffered_weights:
                    in_specs.append(pl.BlockSpec(w.shape, lambda i: (0, 0),
                                                 pipeline_mode=pl.Buffered(1)))
                else:
                    in_specs.append(pl.BlockSpec(w.shape, lambda i: (0, 0)))
            out_specs = pl.BlockSpec((tm, n_out), lambda i: (i, 0))
            return pl.pallas_call(
                kernel,
                out_shape=jax.ShapeDtypeStruct((B, n_out), jnp.float32),
                grid_spec=pl.GridSpec(grid=grid, in_specs=in_specs,
                                      out_specs=out_specs),
                compiler_params=pltpu.CompilerParams(
                    dimension_semantics=("parallel",),
                    vmem_limit_bytes=self.vmem_limit_bytes,
                ),
                cost_estimate=cost,
            )(h, *weights)

        try:
            # Single-buffered resident weights (constant index_map -> no need
            # for double-buffering; halves resident weight VMEM).
            return _call(True)
        except Exception:
            # Installed jax rejects pipeline_mode=Buffered(1): fall back to
            # default (double-buffered) weight blocks -- still correct.
            return _call(False)


# --------------------------------------------------------------------------
def _reference_forward(model, x):
    """Pure-JAX reference matching the kernel numerics (bf16 mul, f32 acc)."""
    h = jnp.reshape(x, (x.shape[0], -1)).astype(jnp.float32)
    n = model.n_layers
    for i in range(n):
        w = model.weights_t[i].astype(model.compute_dtype)
        h = jnp.dot(h.astype(model.compute_dtype), w,
                    preferred_element_type=jnp.float32)
        if i < n - 1:
            h = jnp.where(h >= 0, h, jnp.float32(0.01) * h)
    return h


def _reference_forward_f32(model, x):
    """Pure-f32 reference (matches the original torch module's numerics)."""
    h = jnp.reshape(x, (x.shape[0], -1)).astype(jnp.float32)
    for i, w_t in enumerate(model.weights_t):
        h = h @ w_t
        if i < len(model.weights_t) - 1:
            h = jnp.where(h >= 0, h, 0.01 * h)
    return h


if __name__ == "__main__":
    key = jax.random.PRNGKey(0)
    k_x, k_w, k_x2 = jax.random.split(key, 3)

    # Small shapes consistent with the module: (N, C, H, W) flattened to 64 features.
    batch, C, H, W = 2, 4, 4, 4
    size = (C * H * W, 32, 32, 16)  # 64 -> 32 -> 32 -> 16

    model = ClassicalNeuralNetworkPallas(size, k_w)

    x = jax.random.normal(k_x, (batch, C, H, W), dtype=jnp.float32)
    out = jax.block_until_ready(model(x))
    assert out.shape == (batch, size[-1])
    ref = _reference_forward(model, x)
    assert jnp.allclose(out, ref, atol=2e-3, rtol=2e-3), \
        float(jnp.max(jnp.abs(out - ref)))
    ref32 = _reference_forward_f32(model, x)
    assert jnp.allclose(out, ref32, atol=5e-2, rtol=5e-2)

    # Larger, non-multiple-of-8 batch: exercises the ragged last grid tile.
    batch2 = 300
    x2 = jax.random.normal(k_x2, (batch2, C, H, W), dtype=jnp.float32)
    out2 = jax.block_until_ready(model(x2))
    assert out2.shape == (batch2, size[-1])
    ref2 = _reference_forward(model, x2)
    assert jnp.allclose(out2, ref2, atol=2e-3, rtol=2e-3), \
        float(jnp.max(jnp.abs(out2 - ref2)))

    print("KERNEL_OK")
</pallas_src>

<mosaic_0001>
module attributes {stable_mosaic.version = 11 : i64} {
  func.func @_mlp_group_kernel(%arg0: i32, %arg1: memref<8x64xf32, #tpu.memory_space<vmem>>, %arg2: memref<64x128xbf16, #tpu.memory_space<vmem>>, %arg3: memref<128x128xbf16, #tpu.memory_space<vmem>>, %arg4: memref<128x16xbf16, #tpu.memory_space<vmem>>, %arg5: memref<8x16xf32, #tpu.memory_space<vmem>>) attributes {dimension_semantics = [#tpu.dimension_semantics<parallel>], iteration_bounds = array<i64: 1>, scalar_prefetch = 0 : i64, scratch_operands = 0 : i64, tpu.core_type = #tpu.core_type<tc>, window_params = [{transform_indices = @transform_0, window_bounds = array<i64: 8, 64>}, {pipeline_mode = #tpu.pipeline_mode<synchronous>, transform_indices = @transform_1, window_bounds = array<i64: 64, 128>}, {pipeline_mode = #tpu.pipeline_mode<synchronous>, transform_indices = @transform_2, window_bounds = array<i64: 128, 128>}, {pipeline_mode = #tpu.pipeline_mode<synchronous>, transform_indices = @transform_3, window_bounds = array<i64: 128, 16>}, {transform_indices = @transform_4, window_bounds = array<i64: 8, 16>}]} {
    %c0 = arith.constant 0 : index
    %c0_0 = arith.constant 0 : index
    %0 = vector.load %arg1[%c0, %c0_0] : memref<8x64xf32, #tpu.memory_space<vmem>>, vector<8x64xf32>
    %1 = arith.truncf %0 : vector<8x64xf32> to vector<8x64xbf16>
    %c0_1 = arith.constant 0 : index
    %c0_2 = arith.constant 0 : index
    %2 = vector.load %arg2[%c0_1, %c0_2] : memref<64x128xbf16, #tpu.memory_space<vmem>>, vector<64x128xbf16>
    %cst = arith.constant dense<0.000000e+00> : vector<8x128xf32>
    %3 = tpu.matmul %1, %2, %cst {dimension_numbers = #tpu.dot_dimension_numbers<[1], [0], [0], [1], [0, 0, 1, 1], [], []>} : vector<8x64xbf16>, vector<64x128xbf16>, vector<8x128xf32> -> vector<8x128xf32>
    %cst_3 = arith.constant 0.000000e+00 : f32
    %4 = vector.broadcast %cst_3 : f32 to vector<8x128xf32>
    %5 = arith.cmpf oge, %3, %4 : vector<8x128xf32>
    %cst_4 = arith.constant 0.00999999977 : f32
    %6 = vector.broadcast %cst_4 : f32 to vector<8x128xf32>
    %7 = arith.mulf %6, %3 : vector<8x128xf32>
    %8 = arith.select %5, %3, %7 : vector<8x128xi1>, vector<8x128xf32>
    %9 = arith.truncf %8 : vector<8x128xf32> to vector<8x128xbf16>
    %c0_5 = arith.constant 0 : index
    %c0_6 = arith.constant 0 : index
    %10 = vector.load %arg3[%c0_5, %c0_6] : memref<128x128xbf16, #tpu.memory_space<vmem>>, vector<128x128xbf16>
    %cst_7 = arith.constant dense<0.000000e+00> : vector<8x128xf32>
    %11 = tpu.matmul %9, %10, %cst_7 {dimension_numbers = #tpu.dot_dimension_numbers<[1], [0], [0], [1], [0, 0, 1, 1], [], []>} : vector<8x128xbf16>, vector<128x128xbf16>, vector<8x128xf32> -> vector<8x128xf32>
    %cst_8 = arith.constant 0.000000e+00 : f32
    %12 = vector.broadcast %cst_8 : f32 to vector<8x128xf32>
    %13 = arith.cmpf oge, %11, %12 : vector<8x128xf32>
    %cst_9 = arith.constant 0.00999999977 : f32
    %14 = vector.broadcast %cst_9 : f32 to vector<8x128xf32>
    %15 = arith.mulf %14, %11 : vector<8x128xf32>
    %16 = arith.select %13, %11, %15 : vector<8x128xi1>, vector<8x128xf32>
    %17 = arith.truncf %16 : vector<8x128xf32> to vector<8x128xbf16>
    %c0_10 = arith.constant 0 : index
    %c0_11 = arith.constant 0 : index
    %18 = vector.load %arg4[%c0_10, %c0_11] : memref<128x16xbf16, #tpu.memory_space<vmem>>, vector<128x16xbf16>
    %cst_12 = arith.constant dense<0.000000e+00> : vector<8x16xf32>
    %19 = tpu.matmul %17, %18, %cst_12 {dimension_numbers = #tpu.dot_dimension_numbers<[1], [0], [0], [1], [0, 0, 1, 1], [], []>} : vector<8x128xbf16>, vector<128x16xbf16>, vector<8x16xf32> -> vector<8x16xf32>
    %c0_13 = arith.constant 0 : index
    %c0_14 = arith.constant 0 : index
    %20 = vector.load %arg5[%c0_13, %c0_14] : memref<8x16xf32, #tpu.memory_space<vmem>>, vector<8x16xf32>
    tpu.vector_store %arg5[%c0_13, %c0_14], %19 {strides = array<i32>} : memref<8x16xf32, #tpu.memory_space<vmem>>, vector<8x16xf32>,
    return
  }
  func.func @transform_0(%arg0: i32) -> (i32, i32) {
    %c0_i32 = arith.constant 0 : i32
    %c0_i32_0 = arith.constant 0 : i32
    return %arg0, %c0_i32 : i32, i32
  }
  func.func @transform_1(%arg0: i32) -> (i32, i32) {
    %c0_i32 = arith.constant 0 : i32
    %c0_i32_0 = arith.constant 0 : i32
    %c0_i32_1 = arith.constant 0 : i32
    return %c0_i32, %c0_i32_0 : i32, i32
  }
  func.func @transform_2(%arg0: i32) -> (i32, i32) {
    %c0_i32 = arith.constant 0 : i32
    %c0_i32_0 = arith.constant 0 : i32
    %c0_i32_1 = arith.constant 0 : i32
    return %c0_i32, %c0_i32_0 : i32, i32
  }
  func.func @transform_3(%arg0: i32) -> (i32, i32) {
    %c0_i32 = arith.constant 0 : i32
    %c0_i32_0 = arith.constant 0 : i32
    %c0_i32_1 = arith.constant 0 : i32
    return %c0_i32, %c0_i32_0 : i32, i32
  }
  func.func @transform_4(%arg0: i32) -> (i32, i32) {
    %c0_i32 = arith.constant 0 : i32
    %c0_i32_0 = arith.constant 0 : i32
    return %arg0, %c0_i32 : i32, i32
  }
}

module attributes {stable_mosaic.version = 11 : i64} {
  func.func @_mlp_group_kernel(%arg0: i32, %arg1: memref<8x64xf32, #tpu.memory_space<vmem>>, %arg2: memref<64x128xbf16, #tpu.memory_space<vmem>>, %arg3: memref<128x128xbf16, #tpu.memory_space<vmem>>, %arg4: memref<128x16xbf16, #tpu.memory_space<vmem>>, %arg5: memref<8x16xf32, #tpu.memory_space<vmem>>) attributes {dimension_semantics = [#tpu.dimension_semantics<parallel>], iteration_bounds = array<i64: 1>, scalar_prefetch = 0 : i64, scratch_operands = 0 : i64, tpu.core_type = #tpu.core_type<tc>, window_params = [{transform_indices = @transform_0, window_bounds = array<i64: 8, 64>}, {pipeline_mode = #tpu.pipeline_mode<synchronous>, transform_indices = @transform_1, window_bounds = array<i64: 64, 128>}, {pipeline_mode = #tpu.pipeline_mode<synchronous>, transform_indices = @transform_2, window_bounds = array<i64: 128, 128>}, {pipeline_mode = #tpu.pipeline_mode<synchronous>, transform_indices = @transform_3, window_bounds = array<i64: 128, 16>}, {transform_indices = @transform_4, window_bounds = array<i64: 8, 16>}]} {
    %c0 = arith.constant 0 : index
    %c0_0 = arith.constant 0 : index
    %0 = vector.load %arg1[%c0, %c0_0] : memref<8x64xf32, #tpu.memory_space<vmem>>, vector<8x64xf32>
    %1 = arith.truncf %0 : vector<8x64xf32> to vector<8x64xbf16>
    %c0_1 = arith.constant 0 : index
    %c0_2 = arith.constant 0 : index
    %2 = vector.load %arg2[%c0_1, %c0_2] : memref<64x128xbf16, #tpu.memory_space<vmem>>, vector<64x128xbf16>
    %cst = arith.constant dense<0.000000e+00> : vector<8x128xf32>
    %3 = tpu.matmul %1, %2, %cst {dimension_numbers = #tpu.dot_dimension_numbers<[1], [0], [0], [1], [0, 0, 1, 1], [], []>} : vector<8x64xbf16>, vector<64x128xbf16>, vector<8x128xf32> -> vector<8x128xf32>
    %cst_3 = arith.constant 0.000000e+00 : f32
    %4 = vector.broadcast %cst_3 : f32 to vector<8x128xf32>
    %5 = arith.cmpf oge, %3, %4 : vector<8x128xf32>
    %cst_4 = arith.constant 0.00999999977 : f32
    %6 = vector.broadcast %cst_4 : f32 to vector<8x128xf32>
    %7 = arith.mulf %6, %3 : vector<8x128xf32>
    %8 = arith.select %5, %3, %7 : vector<8x128xi1>, vector<8x128xf32>
    %9 = arith.truncf %8 : vector<8x128xf32> to vector<8x128xbf16>
    %c0_5 = arith.constant 0 : index
    %c0_6 = arith.constant 0 : index
    %10 = vector.load %arg3[%c0_5, %c0_6] : memref<128x128xbf16, #tpu.memory_space<vmem>>, vector<128x128xbf16>
    %cst_7 = arith.constant dense<0.000000e+00> : vector<8x128xf32>
    %11 = tpu.matmul %9, %10, %cst_7 {dimension_numbers = #tpu.dot_dimension_numbers<[1], [0], [0], [1], [0, 0, 1, 1], [], []>} : vector<8x128xbf16>, vector<128x128xbf16>, vector<8x128xf32> -> vector<8x128xf32>
    %cst_8 = arith.constant 0.000000e+00 : f32
    %12 = vector.broadcast %cst_8 : f32 to vector<8x128xf32>
    %13 = arith.cmpf oge, %11, %12 : vector<8x128xf32>
    %cst_9 = arith.constant 0.00999999977 : f32
    %14 = vector.broadcast %cst_9 : f32 to vector<8x128xf32>
    %15 = arith.mulf %14, %11 : vector<8x128xf32>
    %16 = arith.select %13, %11, %15 : vector<8x128xi1>, vector<8x128xf32>
    %17 = arith.truncf %16 : vector<8x128xf32> to vector<8x128xbf16>
    %c0_10 = arith.constant 0 : index
    %c0_11 = arith.constant 0 : index
    %18 = vector.load %arg4[%c0_10, %c0_11] : memref<128x16xbf16, #tpu.memory_space<vmem>>, vector<128x16xbf16>
    %cst_12 = arith.constant dense<0.000000e+00> : vector<8x16xf32>
    %19 = tpu.matmul %17, %18, %cst_12 {dimension_numbers = #tpu.dot_dimension_numbers<[1], [0], [0], [1], [0, 0, 1, 1], [], []>} : vector<8x128xbf16>, vector<128x16xbf16>, vector<8x16xf32> -> vector<8x16xf32>
    %c0_13 = arith.constant 0 : index
    %c0_14 = arith.constant 0 : index
    %20 = vector.load %arg5[%c0_13, %c0_14] : memref<8x16xf32, #tpu.memory_space<vmem>>, vector<8x16xf32>
    tpu.vector_store %arg5[%c0_13, %c0_14], %19 {strides = array<i32>} : memref<8x16xf32, #tpu.memory_space<vmem>>, vector<8x16xf32>,
    return
  }
  func.func @transform_0(%arg0: i32) -> (i32, i32) {
    %c0_i32 = arith.constant 0 : i32
    %c0_i32_0 = arith.constant 0 : i32
    return %arg0, %c0_i32 : i32, i32
  }
  func.func @transform_1(%arg0: i32) -> (i32, i32) {
    %c0_i32 = arith.constant 0 : i32
    %c0_i32_0 = arith.constant 0 : i32
    %c0_i32_1 = arith.constant 0 : i32
    return %c0_i32, %c0_i32_0 : i32, i32
  }
  func.func @transform_2(%arg0: i32) -> (i32, i32) {
    %c0_i32 = arith.constant 0 : i32
    %c0_i32_0 = arith.constant 0 : i32
    %c0_i32_1 = arith.constant 0 : i32
    return %c0_i32, %c0_i32_0 : i32, i32
  }
  func.func @transform_3(%arg0: i32) -> (i32, i32) {
    %c0_i32 = arith.constant 0 : i32
    %c0_i32_0 = arith.constant 0 : i32
    %c0_i32_1 = arith.constant 0 : i32
    return %c0_i32, %c0_i32_0 : i32, i32
  }
  func.func @transform_4(%arg0: i32) -> (i32, i32) {
    %c0_i32 = arith.constant 0 : i32
    %c0_i32_0 = arith.constant 0 : i32
    return %arg0, %c0_i32 : i32, i32
  }
}

</mosaic_0001>

<llo_original>
// kernel: tpu_custom_call.1
$region0: #{tpu_custom_call.1}
  #allocation0 [shape = 'u32[]', space=smem, size = 0x4, offset = 0x4, fixed_abs, tag = 'smem constant byte address 0x4 - core index']
  #allocation1 [shape = 'u32[72,128]{1,0:T(1,128)}', space=vmem, size = 0x9000, scoped, tag = 'internal scratch']
  %s0 = inlined_call_operand.vmem [shape: f32[2,64], index: 0, kind: input, shape index: {}]
  %s1 = inlined_call_operand.hbm [shape: bf16[64,128], index: 1, kind: input, shape index: {}]
  %s2 = inlined_call_operand.vmem [shape: bf16[128,128], index: 2, kind: input, shape index: {}]
  %s3 = inlined_call_operand.vmem [shape: bf16[128,16], index: 3, kind: input, shape index: {}]
  %s4 = inlined_call_operand.hbm [shape: f32[2,16], index: 4, kind: output, shape index: {}]
  %s5 = sld [smem:[#allocation0]]
  $region30: #{tpu_custom_call.1} parent=0
    _
  %s7 = ssub.s32 1, %s5
  %s8 = scalar_select 0, %s7, %s5
  $region1: #{tpu_custom_call.1} parent=0
    #allocation2 [shape = 'u8[16384]{0}', space=vmem, size = 0x4000, scoped, tag = 'input window, operand 1, single buffered']
    #allocation3 [shape = 's32[1]{0}', space=sflag, size = 0x4, scoped, tag = 'scoped memory for tpu_custom_call.1']
    #allocation4 [shape = 's32[1]{0}', space=sflag, size = 0x4, scoped, tag = 'scoped memory for tpu_custom_call.1']
    #allocation5 [shape = 'u8[4096]{0}', space=vmem, size = 0x1000, scoped, tag = 'output window, operand 0, single buffered']
    %9 = vsyncpa [#allocation3], 0
    %10 = vsyncpa [#allocation4], 0
    // Predicated region
    $region2: #{tpu_custom_call.1} parent=1 // pred_check
      _
    $region3: #{tpu_custom_call.1} parent=1 // pred_check_branch
      %12 = sbr.rel (0) target = $region5
    $region4: #{tpu_custom_call.1} parent=1 // pred_region
      _
    $region5: #{tpu_custom_call.1} parent=1 // pred_fallthru
      _
    // Predicated region
    $region6: #{tpu_custom_call.1} parent=1 // pred_check
      _
    $region7: #{tpu_custom_call.1} parent=1 // pred_check_branch
      %14 = sbr.rel (0) target = $region9
    $region8: #{tpu_custom_call.1} parent=1 // pred_region
      %16 = vsyncadd [#allocation3], 0
      %s17 = sshll.u32 %s1, 4
      %s18 = int_to_ptr.hbm [resolvable:$true] %s17
      %s19 = sshll.u32 [#allocation2], 4
      %s20 = int_to_ptr.vmem [resolvable:$true] %s19
      %25 = dma.hbm_to_vmem [thread:$0]  %s18, 512, %s20, [#allocation3], 64, 64, 4
    $region9: #{tpu_custom_call.1} parent=1 // pred_fallthru
      _
    // Predicated region
    $region10: #{tpu_custom_call.1} parent=1 // pred_check
      _
    $region11: #{tpu_custom_call.1} parent=1 // pred_check_branch
      %27 = sbr.rel (0) target = $region13
    $region12: #{tpu_custom_call.1} parent=1 // pred_region
      _
    $region13: #{tpu_custom_call.1} parent=1 // pred_fallthru
      _
    // Predicated region
    $region14: #{tpu_custom_call.1} parent=1 // pred_check
      _
    $region15: #{tpu_custom_call.1} parent=1 // pred_check_branch
      %29 = sbr.rel (0) target = $region17
    $region16: #{tpu_custom_call.1} parent=1 // pred_region
      _
    $region17: #{tpu_custom_call.1} parent=1 // pred_fallthru
      _
    // Predicated region
    $region18: #{tpu_custom_call.1} parent=1 // pred_check
      _
    $region19: #{tpu_custom_call.1} parent=1 // pred_check_branch
      %31 = sbr.rel (0) target = $region21
    $region20: #{tpu_custom_call.1} parent=1 // pred_region
      %33 = dma.done [#allocation3], 512
    $region21: #{tpu_custom_call.1} parent=1 // pred_fallthru
      _
    %v35 = vld [vmem:[%s0] sm:$0xff]
    %v36 = vpack.c.bf16 %v35, %v35
    %v37 = vld [vmem:[#allocation2] sm:$0xf]
    %v38 = vld [vmem:[#allocation2 + $0x4] sm:$0xf]
    %v39 = vld [vmem:[#allocation2 + $0x8] sm:$0xf]
    %v40 = vld [vmem:[#allocation2 + $0xc] sm:$0xf]
    %v41 = vld [vmem:[#allocation2 + $0x10] sm:$0xf]
    %v42 = vld [vmem:[#allocation2 + $0x14] sm:$0xf]
    %v43 = vld [vmem:[#allocation2 + $0x18] sm:$0xf]
    %v44 = vld [vmem:[#allocation2 + $0x1c] sm:$0xf]
    %v53 = vunpack.c.l.b16 %v37
    %v54 = vunpack.c.l.b16 %v38
    %v55 = vunpack.c.l.b16 %v39
    %v56 = vunpack.c.l.b16 %v40
    %v57 = vunpack.c.l.b16 %v41
    %v58 = vunpack.c.l.b16 %v42
    %v59 = vunpack.c.l.b16 %v43
    %v60 = vunpack.c.l.b16 %v44
    %v61 = vpack.c.b16 %v54, %v53
    %v62 = vpack.c.b16 %v56, %v55
    %v63 = vpack.c.b16 %v58, %v57
    %v64 = vpack.c.b16 %v60, %v59
    %vm69 = vcmask 523264
    %v71 = vsel %vm69, %v36, 0
    %73 = vmatpush.bf16.msra.mxu0 0
    %74 = vmatpush.bf16.msra.mxu0 0
    %75 = vmatpush.bf16.msra.mxu0 0
    %76 = vmatpush.bf16.msra.mxu0 0
    %77 = vmatpush.bf16.msra.mxu0 %v64
    %78 = vmatpush.bf16.msra.mxu0 %v63
    %79 = vmatpush.bf16.msra.mxu0 %v62
    %80 = vmatpush.bf16.msra.mxu0 %v61
    %81 = vmatmul.bf16.gmra.mxu0 %v71
    %v82 = vpop.f32.mrf.mxu0
    %v83 = vadd.f32 0.0, %v82
    %v84 = vpop.f32.mrf.mxu0
    %85 = vdwg.mxu0
    %vm86 = vcmp.ge.f32.partialorder %v83, 0.0
    %v87 = vmul.f32 %v83, 0.01
    %v88 = vsel %vm86, %v83, %v87
    %v89 = vpack.c.bf16 %v88, %v88
    %v90 = vld [vmem:[%s2] sm:$0xf]
    %v91 = vld [vmem:[%s2 + $0x4] sm:$0xf]
    %v92 = vld [vmem:[%s2 + $0x8] sm:$0xf]
    %v93 = vld [vmem:[%s2 + $0xc] sm:$0xf]
    %v94 = vld [vmem:[%s2 + $0x10] sm:$0xf]
    %v95 = vld [vmem:[%s2 + $0x14] sm:$0xf]
    %v96 = vld [vmem:[%s2 + $0x18] sm:$0xf]
    %v97 = vld [vmem:[%s2 + $0x1c] sm:$0xf]
    %v98 = vld [vmem:[%s2 + $0x20] sm:$0xf]
    %v99 = vld [vmem:[%s2 + $0x24] sm:$0xf]
    %v100 = vld [vmem:[%s2 + $0x28] sm:$0xf]
    %v101 = vld [vmem:[%s2 + $0x2c] sm:$0xf]
    %v102 = vld [vmem:[%s2 + $0x30] sm:$0xf]
    %v103 = vld [vmem:[%s2 + $0x34] sm:$0xf]
    %v104 = vld [vmem:[%s2 + $0x38] sm:$0xf]
    %v105 = vld [vmem:[%s2 + $0x3c] sm:$0xf]
    %v122 = vunpack.c.l.b16 %v90
    %v123 = vunpack.c.l.b16 %v91
    %v124 = vunpack.c.l.b16 %v92
    %v125 = vunpack.c.l.b16 %v93
    %v126 = vunpack.c.l.b16 %v94
    %v127 = vunpack.c.l.b16 %v95
    %v128 = vunpack.c.l.b16 %v96
    %v129 = vunpack.c.l.b16 %v97
    %v130 = vunpack.c.l.b16 %v98
    %v131 = vunpack.c.l.b16 %v99
    %v132 = vunpack.c.l.b16 %v100
    %v133 = vunpack.c.l.b16 %v101
    %v134 = vunpack.c.l.b16 %v102
    %v135 = vunpack.c.l.b16 %v103
    %v136 = vunpack.c.l.b16 %v104
    %v137 = vunpack.c.l.b16 %v105
    %v138 = vpack.c.b16 %v123, %v122
    %v139 = vpack.c.b16 %v125, %v124
    %v140 = vpack.c.b16 %v127, %v126
    %v141 = vpack.c.b16 %v129, %v128
    %v142 = vpack.c.b16 %v131, %v130
    %v143 = vpack.c.b16 %v133, %v132
    %v144 = vpack.c.b16 %v135, %v134
    %v145 = vpack.c.b16 %v137, %v136
    %154 = vmatpush.bf16.msra.mxu0 %v145
    %155 = vmatpush.bf16.msra.mxu0 %v144
    %156 = vmatpush.bf16.msra.mxu0 %v143
    %157 = vmatpush.bf16.msra.mxu0 %v142
    %158 = vmatpush.bf16.msra.mxu0 %v141
    %159 = vmatpush.bf16.msra.mxu0 %v140
    %160 = vmatpush.bf16.msra.mxu0 %v139
    %161 = vmatpush.bf16.msra.mxu0 %v138
    %162 = vmatmul.bf16.gmra.mxu0 %v89
    %v163 = vpop.f32.mrf.mxu0
    %v164 = vadd.f32 0.0, %v163
    %v165 = vpop.f32.mrf.mxu0
    %166 = vdwg.mxu0
    %vm167 = vcmp.ge.f32.partialorder %v164, 0.0
    %v168 = vmul.f32 %v164, 0.01
    %v169 = vsel %vm167, %v164, %v168
    %v170 = vpack.c.bf16 %v169, %v169
    %v171 = vld [vmem:[%s3] sm:$0xf]
    %v172 = vld [vmem:[%s3 + $0x4] sm:$0xf]
    %v173 = vld [vmem:[%s3 + $0x8] sm:$0xf]
    %v174 = vld [vmem:[%s3 + $0xc] sm:$0xf]
    %v175 = vld [vmem:[%s3 + $0x10] sm:$0xf]
    %v176 = vld [vmem:[%s3 + $0x14] sm:$0xf]
    %v177 = vld [vmem:[%s3 + $0x18] sm:$0xf]
    %v178 = vld [vmem:[%s3 + $0x1c] sm:$0xf]
    %v179 = vld [vmem:[%s3 + $0x20] sm:$0xf]
    %v180 = vld [vmem:[%s3 + $0x24] sm:$0xf]
    %v181 = vld [vmem:[%s3 + $0x28] sm:$0xf]
    %v182 = vld [vmem:[%s3 + $0x2c] sm:$0xf]
    %v183 = vld [vmem:[%s3 + $0x30] sm:$0xf]
    %v184 = vld [vmem:[%s3 + $0x34] sm:$0xf]
    %v185 = vld [vmem:[%s3 + $0x38] sm:$0xf]
    %v186 = vld [vmem:[%s3 + $0x3c] sm:$0xf]
    %v203 = vunpack.c.l.b16 %v171
    %v204 = vunpack.c.l.b16 %v172
    %v205 = vunpack.c.l.b16 %v173
    %v206 = vunpack.c.l.b16 %v174
    %v207 = vunpack.c.l.b16 %v175
    %v208 = vunpack.c.l.b16 %v176
    %v209 = vunpack.c.l.b16 %v177
    %v210 = vunpack.c.l.b16 %v178
    %v211 = vunpack.c.l.b16 %v179
    %v212 = vunpack.c.l.b16 %v180
    %v213 = vunpack.c.l.b16 %v181
    %v214 = vunpack.c.l.b16 %v182
    %v215 = vunpack.c.l.b16 %v183
    %v216 = vunpack.c.l.b16 %v184
    %v217 = vunpack.c.l.b16 %v185
    %v218 = vunpack.c.l.b16 %v186
    %v219 = vpack.c.b16 %v204, %v203
    %v220 = vpack.c.b16 %v206, %v205
    %v221 = vpack.c.b16 %v208, %v207
    %v222 = vpack.c.b16 %v210, %v209
    %v223 = vpack.c.b16 %v212, %v211
    %v224 = vpack.c.b16 %v214, %v213
    %v225 = vpack.c.b16 %v216, %v215
    %v226 = vpack.c.b16 %v218, %v217
    %235 = vmatpush.bf16.msra.mxu0 %v226
    %236 = vmatpush.bf16.msra.mxu0 %v225
    %237 = vmatpush.bf16.msra.mxu0 %v224
    %238 = vmatpush.bf16.msra.mxu0 %v223
    %239 = vmatpush.bf16.msra.mxu0 %v222
    %240 = vmatpush.bf16.msra.mxu0 %v221
    %241 = vmatpush.bf16.msra.mxu0 %v220
    %242 = vmatpush.bf16.msra.mxu0 %v219
    %243 = vmatmul.bf16.gmra.mxu0 %v170
    %v244 = vpop.f32.mrf.mxu0
    %v245 = vadd.f32 0.0, %v244
    %v246 = vpop.f32.mrf.mxu0
    %247 = vdwg.mxu0
    %vm248 = vcmask 130048
    %249 = vst.msk [vmem:[#allocation5] sm:$0xff] %vm248, %v245
    // Predicated region
    $region22: #{tpu_custom_call.1} parent=1 // pred_check
      _
    $region23: #{tpu_custom_call.1} parent=1 // pred_check_branch
      %251 = sbr.rel (0) target = $region25
    $region24: #{tpu_custom_call.1} parent=1 // pred_region
      %253 = vsyncadd [#allocation4], 96
      %s254 = sshll.u32 [#allocation5], 4
      %s255 = int_to_ptr.vmem [resolvable:$true] %s254
      %s256 = sshll.u32 %s4, 4
      %s257 = int_to_ptr.hbm [resolvable:$true] %s256
      %262 = dma.vmem_to_hbm [thread:$0]  %s255, 32, %s257, [#allocation4], 32, 32, 2
    $region25: #{tpu_custom_call.1} parent=1 // pred_fallthru
      _
    // Predicated region
    $region26: #{tpu_custom_call.1} parent=1 // pred_check
      _
    $region27: #{tpu_custom_call.1} parent=1 // pred_check_branch
      %264 = sbr.rel (0) target = $region29
    $region28: #{tpu_custom_call.1} parent=1 // pred_region
      %266 = dma.done [#allocation4], 128
    $region29: #{tpu_custom_call.1} parent=1 // pred_fallthru
      _
    %267 = vsyncpa [#allocation3], 1
    %268 = vsyncpa [#allocation4], 1

// kernel: tpu_custom_call.1
$region0: #{tpu_custom_call.1}
  #allocation0 [shape = 'u32[]', space=smem, size = 0x4, offset = 0x4, fixed_abs, tag = 'smem constant byte address 0x4 - core index']
  #allocation1 [shape = 'u32[72,128]{1,0:T(1,128)}', space=vmem, size = 0x9000, scoped, tag = 'internal scratch']
  %s0 = inlined_call_operand.vmem [shape: f32[2,64], index: 0, kind: input, shape index: {}]
  %s1 = inlined_call_operand.hbm [shape: bf16[64,128], index: 1, kind: input, shape index: {}]
  %s2 = inlined_call_operand.vmem [shape: bf16[128,128], index: 2, kind: input, shape index: {}]
  %s3 = inlined_call_operand.vmem [shape: bf16[128,16], index: 3, kind: input, shape index: {}]
  %s4 = inlined_call_operand.hbm [shape: f32[2,16], index: 4, kind: output, shape index: {}]
  %s5 = sld [smem:[#allocation0]]
  $region30: #{tpu_custom_call.1} parent=0
    _
  %s7 = ssub.s32 1, %s5
  %s8 = scalar_select 0, %s7, %s5
  $region1: #{tpu_custom_call.1} parent=0
    #allocation2 [shape = 'u8[16384]{0}', space=vmem, size = 0x4000, scoped, tag = 'input window, operand 1, single buffered']
    #allocation3 [shape = 's32[1]{0}', space=sflag, size = 0x4, scoped, tag = 'scoped memory for tpu_custom_call.1']
    #allocation4 [shape = 's32[1]{0}', space=sflag, size = 0x4, scoped, tag = 'scoped memory for tpu_custom_call.1']
    #allocation5 [shape = 'u8[4096]{0}', space=vmem, size = 0x1000, scoped, tag = 'output window, operand 0, single buffered']
    %9 = vsyncpa [#allocation3], 0
    %10 = vsyncpa [#allocation4], 0
    // Predicated region
    $region2: #{tpu_custom_call.1} parent=1 // pred_check
      _
    $region3: #{tpu_custom_call.1} parent=1 // pred_check_branch
      %12 = sbr.rel (0) target = $region5
    $region4: #{tpu_custom_call.1} parent=1 // pred_region
      _
    $region5: #{tpu_custom_call.1} parent=1 // pred_fallthru
      _
    // Predicated region
    $region6: #{tpu_custom_call.1} parent=1 // pred_check
      _
    $region7: #{tpu_custom_call.1} parent=1 // pred_check_branch
      %14 = sbr.rel (0) target = $region9
    $region8: #{tpu_custom_call.1} parent=1 // pred_region
      %16 = vsyncadd [#allocation3], 0
      %s17 = sshll.u32 %s1, 4
      %s18 = int_to_ptr.hbm [resolvable:$true] %s17
      %s19 = sshll.u32 [#allocation2], 4
      %s20 = int_to_ptr.vmem [resolvable:$true] %s19
      %25 = dma.hbm_to_vmem [thread:$0]  %s18, 512, %s20, [#allocation3], 64, 64, 4
    $region9: #{tpu_custom_call.1} parent=1 // pred_fallthru
      _
    // Predicated region
    $region10: #{tpu_custom_call.1} parent=1 // pred_check
      _
    $region11: #{tpu_custom_call.1} parent=1 // pred_check_branch
      %27 = sbr.rel (0) target = $region13
    $region12: #{tpu_custom_call.1} parent=1 // pred_region
      _
    $region13: #{tpu_custom_call.1} parent=1 // pred_fallthru
      _
    // Predicated region
    $region14: #{tpu_custom_call.1} parent=1 // pred_check
      _
    $region15: #{tpu_custom_call.1} parent=1 // pred_check_branch
      %29 = sbr.rel (0) target = $region17
    $region16: #{tpu_custom_call.1} parent=1 // pred_region
      _
    $region17: #{tpu_custom_call.1} parent=1 // pred_fallthru
      _
    // Predicated region
    $region18: #{tpu_custom_call.1} parent=1 // pred_check
      _
    $region19: #{tpu_custom_call.1} parent=1 // pred_check_branch
      %31 = sbr.rel (0) target = $region21
    $region20: #{tpu_custom_call.1} parent=1 // pred_region
      %33 = dma.done [#allocation3], 512
    $region21: #{tpu_custom_call.1} parent=1 // pred_fallthru
      _
    %v35 = vld [vmem:[%s0] sm:$0xff]
    %v36 = vpack.c.bf16 %v35, %v35
    %v37 = vld [vmem:[#allocation2] sm:$0xf]
    %v38 = vld [vmem:[#allocation2 + $0x4] sm:$0xf]
    %v39 = vld [vmem:[#allocation2 + $0x8] sm:$0xf]
    %v40 = vld [vmem:[#allocation2 + $0xc] sm:$0xf]
    %v41 = vld [vmem:[#allocation2 + $0x10] sm:$0xf]
    %v42 = vld [vmem:[#allocation2 + $0x14] sm:$0xf]
    %v43 = vld [vmem:[#allocation2 + $0x18] sm:$0xf]
    %v44 = vld [vmem:[#allocation2 + $0x1c] sm:$0xf]
    %v53 = vunpack.c.l.b16 %v37
    %v54 = vunpack.c.l.b16 %v38
    %v55 = vunpack.c.l.b16 %v39
    %v56 = vunpack.c.l.b16 %v40
    %v57 = vunpack.c.l.b16 %v41
    %v58 = vunpack.c.l.b16 %v42
    %v59 = vunpack.c.l.b16 %v43
    %v60 = vunpack.c.l.b16 %v44
    %v61 = vpack.c.b16 %v54, %v53
    %v62 = vpack.c.b16 %v56, %v55
    %v63 = vpack.c.b16 %v58, %v57
    %v64 = vpack.c.b16 %v60, %v59
    %vm69 = vcmask 523264
    %v71 = vsel %vm69, %v36, 0
    %73 = vmatpush.bf16.msra.mxu0 0
    %74 = vmatpush.bf16.msra.mxu0 0
    %75 = vmatpush.bf16.msra.mxu0 0
    %76 = vmatpush.bf16.msra.mxu0 0
    %77 = vmatpush.bf16.msra.mxu0 %v64
    %78 = vmatpush.bf16.msra.mxu0 %v63
    %79 = vmatpush.bf16.msra.mxu0 %v62
    %80 = vmatpush.bf16.msra.mxu0 %v61
    %81 = vmatmul.bf16.gmra.mxu0 %v71
    %v82 = vpop.f32.mrf.mxu0
    %v83 = vadd.f32 0.0, %v82
    %v84 = vpop.f32.mrf.mxu0
    %85 = vdwg.mxu0
    %vm86 = vcmp.ge.f32.partialorder %v83, 0.0
    %v87 = vmul.f32 %v83, 0.01
    %v88 = vsel %vm86, %v83, %v87
    %v89 = vpack.c.bf16 %v88, %v88
    %v90 = vld [vmem:[%s2] sm:$0xf]
    %v91 = vld [vmem:[%s2 + $0x4] sm:$0xf]
    %v92 = vld [vmem:[%s2 + $0x8] sm:$0xf]
    %v93 = vld [vmem:[%s2 + $0xc] sm:$0xf]
    %v94 = vld [vmem:[%s2 + $0x10] sm:$0xf]
    %v95 = vld [vmem:[%s2 + $0x14] sm:$0xf]
    %v96 = vld [vmem:[%s2 + $0x18] sm:$0xf]
    %v97 = vld [vmem:[%s2 + $0x1c] sm:$0xf]
    %v98 = vld [vmem:[%s2 + $0x20] sm:$0xf]
    %v99 = vld [vmem:[%s2 + $0x24] sm:$0xf]
    %v100 = vld [vmem:[%s2 + $0x28] sm:$0xf]
    %v101 = vld [vmem:[%s2 + $0x2c] sm:$0xf]
    %v102 = vld [vmem:[%s2 + $0x30] sm:$0xf]
    %v103 = vld [vmem:[%s2 + $0x34] sm:$0xf]
    %v104 = vld [vmem:[%s2 + $0x38] sm:$0xf]
    %v105 = vld [vmem:[%s2 + $0x3c] sm:$0xf]
    %v122 = vunpack.c.l.b16 %v90
    %v123 = vunpack.c.l.b16 %v91
    %v124 = vunpack.c.l.b16 %v92
    %v125 = vunpack.c.l.b16 %v93
    %v126 = vunpack.c.l.b16 %v94
    %v127 = vunpack.c.l.b16 %v95
    %v128 = vunpack.c.l.b16 %v96
    %v129 = vunpack.c.l.b16 %v97
    %v130 = vunpack.c.l.b16 %v98
    %v131 = vunpack.c.l.b16 %v99
    %v132 = vunpack.c.l.b16 %v100
    %v133 = vunpack.c.l.b16 %v101
    %v134 = vunpack.c.l.b16 %v102
    %v135 = vunpack.c.l.b16 %v103
    %v136 = vunpack.c.l.b16 %v104
    %v137 = vunpack.c.l.b16 %v105
    %v138 = vpack.c.b16 %v123, %v122
    %v139 = vpack.c.b16 %v125, %v124
    %v140 = vpack.c.b16 %v127, %v126
    %v141 = vpack.c.b16 %v129, %v128
    %v142 = vpack.c.b16 %v131, %v130
    %v143 = vpack.c.b16 %v133, %v132
    %v144 = vpack.c.b16 %v135, %v134
    %v145 = vpack.c.b16 %v137, %v136
    %154 = vmatpush.bf16.msra.mxu0 %v145
    %155 = vmatpush.bf16.msra.mxu0 %v144
    %156 = vmatpush.bf16.msra.mxu0 %v143
    %157 = vmatpush.bf16.msra.mxu0 %v142
    %158 = vmatpush.bf16.msra.mxu0 %v141
    %159 = vmatpush.bf16.msra.mxu0 %v140
    %160 = vmatpush.bf16.msra.mxu0 %v139
    %161 = vmatpush.bf16.msra.mxu0 %v138
    %162 = vmatmul.bf16.gmra.mxu0 %v89
    %v163 = vpop.f32.mrf.mxu0
    %v164 = vadd.f32 0.0, %v163
    %v165 = vpop.f32.mrf.mxu0
    %166 = vdwg.mxu0
    %vm167 = vcmp.ge.f32.partialorder %v164, 0.0
    %v168 = vmul.f32 %v164, 0.01
    %v169 = vsel %vm167, %v164, %v168
    %v170 = vpack.c.bf16 %v169, %v169
    %v171 = vld [vmem:[%s3] sm:$0xf]
    %v172 = vld [vmem:[%s3 + $0x4] sm:$0xf]
    %v173 = vld [vmem:[%s3 + $0x8] sm:$0xf]
    %v174 = vld [vmem:[%s3 + $0xc] sm:$0xf]
    %v175 = vld [vmem:[%s3 + $0x10] sm:$0xf]
    %v176 = vld [vmem:[%s3 + $0x14] sm:$0xf]
    %v177 = vld [vmem:[%s3 + $0x18] sm:$0xf]
    %v178 = vld [vmem:[%s3 + $0x1c] sm:$0xf]
    %v179 = vld [vmem:[%s3 + $0x20] sm:$0xf]
    %v180 = vld [vmem:[%s3 + $0x24] sm:$0xf]
    %v181 = vld [vmem:[%s3 + $0x28] sm:$0xf]
    %v182 = vld [vmem:[%s3 + $0x2c] sm:$0xf]
    %v183 = vld [vmem:[%s3 + $0x30] sm:$0xf]
    %v184 = vld [vmem:[%s3 + $0x34] sm:$0xf]
    %v185 = vld [vmem:[%s3 + $0x38] sm:$0xf]
    %v186 = vld [vmem:[%s3 + $0x3c] sm:$0xf]
    %v203 = vunpack.c.l.b16 %v171
    %v204 = vunpack.c.l.b16 %v172
    %v205 = vunpack.c.l.b16 %v173
    %v206 = vunpack.c.l.b16 %v174
    %v207 = vunpack.c.l.b16 %v175
    %v208 = vunpack.c.l.b16 %v176
    %v209 = vunpack.c.l.b16 %v177
    %v210 = vunpack.c.l.b16 %v178
    %v211 = vunpack.c.l.b16 %v179
    %v212 = vunpack.c.l.b16 %v180
    %v213 = vunpack.c.l.b16 %v181
    %v214 = vunpack.c.l.b16 %v182
    %v215 = vunpack.c.l.b16 %v183
    %v216 = vunpack.c.l.b16 %v184
    %v217 = vunpack.c.l.b16 %v185
    %v218 = vunpack.c.l.b16 %v186
    %v219 = vpack.c.b16 %v204, %v203
    %v220 = vpack.c.b16 %v206, %v205
    %v221 = vpack.c.b16 %v208, %v207
    %v222 = vpack.c.b16 %v210, %v209
    %v223 = vpack.c.b16 %v212, %v211
    %v224 = vpack.c.b16 %v214, %v213
    %v225 = vpack.c.b16 %v216, %v215
    %v226 = vpack.c.b16 %v218, %v217
    %235 = vmatpush.bf16.msra.mxu0 %v226
    %236 = vmatpush.bf16.msra.mxu0 %v225
    %237 = vmatpush.bf16.msra.mxu0 %v224
    %238 = vmatpush.bf16.msra.mxu0 %v223
    %239 = vmatpush.bf16.msra.mxu0 %v222
    %240 = vmatpush.bf16.msra.mxu0 %v221
    %241 = vmatpush.bf16.msra.mxu0 %v220
    %242 = vmatpush.bf16.msra.mxu0 %v219
    %243 = vmatmul.bf16.gmra.mxu0 %v170
    %v244 = vpop.f32.mrf.mxu0
    %v245 = vadd.f32 0.0, %v244
    %v246 = vpop.f32.mrf.mxu0
    %247 = vdwg.mxu0
    %vm248 = vcmask 130048
    %249 = vst.msk [vmem:[#allocation5] sm:$0xff] %vm248, %v245
    // Predicated region
    $region22: #{tpu_custom_call.1} parent=1 // pred_check
      _
    $region23: #{tpu_custom_call.1} parent=1 // pred_check_branch
      %251 = sbr.rel (0) target = $region25
    $region24: #{tpu_custom_call.1} parent=1 // pred_region
      %253 = vsyncadd [#allocation4], 96
      %s254 = sshll.u32 [#allocation5], 4
      %s255 = int_to_ptr.vmem [resolvable:$true] %s254
      %s256 = sshll.u32 %s4, 4
      %s257 = int_to_ptr.hbm [resolvable:$true] %s256
      %262 = dma.vmem_to_hbm [thread:$0]  %s255, 32, %s257, [#allocation4], 32, 32, 2
    $region25: #{tpu_custom_call.1} parent=1 // pred_fallthru
      _
    // Predicated region
    $region26: #{tpu_custom_call.1} parent=1 // pred_check
      _
    $region27: #{tpu_custom_call.1} parent=1 // pred_check_branch
      %264 = sbr.rel (0) target = $region29
    $region28: #{tpu_custom_call.1} parent=1 // pred_region
      %266 = dma.done [#allocation4], 128
    $region29: #{tpu_custom_call.1} parent=1 // pred_fallthru
      _
    %267 = vsyncpa [#allocation3], 1
    %268 = vsyncpa [#allocation4], 1

</llo_original>
